<compile_context>
chip_gen: v7x
topology: tpu7x:2x2x1
jax: 0.10.0
libtpu: 0.0.40
codegen_flags: <defaults>
</compile_context>

<pallas_src>
import functools

import jax
import jax.numpy as jnp
import numpy as np
from jax.experimental import pallas as pl
from jax.experimental.pallas import tpu as pltpu


def _pack_block_diag(w):
    """(E, dp, dh) -> (E*dp, E*dh) block-diagonal (one-time wrapper-side repack)."""
    E, dp, dh = w.shape
    eye = jnp.eye(E, dtype=w.dtype)
    return jnp.einsum("ef,eij->eifj", eye, w).reshape(E * dp, E * dh)


@functools.partial(jax.jit, static_argnames=("flips", "param_dtype"))
def _mlp_forward_impl(x, hidden_ws, hidden_bs, w_out, b_out, masks, *,
                      flips, param_dtype):
    B, d_in = x.shape
    E, d_last, d_out = w_out.shape           # d_last == d_in when n_hidden == 0
    n_hidden = len(hidden_ws)
    masked = masks is not None
    reduce_final = (d_out == 1)
    K = E * d_last

    x = x.astype(jnp.float32)

    # ---------------- pack hidden layers (fuse ensemble into wide matmuls) ----
    w_mats, b_rows = [], []
    for li, (w, b) in enumerate(zip(hidden_ws, hidden_bs)):
        _, dp, dh = w.shape
        if li == 0:
            # shared input: concat member weights along the output axis
            wp = jnp.transpose(w, (1, 0, 2)).reshape(dp, E * dh)      # (d_in, E*h1)
        else:
            wp = _pack_block_diag(w)                                   # (E*dp, E*dh)
        w_mats.append(wp.astype(jnp.float32))
        b_rows.append(b.reshape(E * dh).astype(jnp.float32))

    # ---------------- pack output layer -------------------------------------
    extra_out_mat = None
    if masked:
        if n_hidden == 0:
            w_o = jnp.transpose(w_out, (1, 0, 2)).reshape(d_in, E * d_out)
            b_o = b_out.reshape(E * d_out)
        elif reduce_final:
            w_o = w_out.reshape(K, 1).T                                # (1, K) lane-dense row
            b_o = b_out.reshape(E)                                     # per-member bias
        else:
            w_o = w_out.reshape(K, d_out)                              # dense vstack, no zeros
            b_o = jnp.zeros((d_out,), jnp.float32)                     # unused in this case
            extra_out_mat = b_out.reshape(E, d_out)                    # bias matrix (E, d_out)
    else:
        inv_e = 1.0 / float(E)                                         # fold 1/E into weights
        if n_hidden == 0:
            w_dense = jnp.sum(w_out, axis=0) * inv_e                   # (d_in, d_out)
        else:
            w_dense = w_out.reshape(K, d_out) * inv_e                  # (K, d_out)
        b_o = jnp.mean(b_out, axis=0).reshape(d_out)
        w_o = w_dense.T if reduce_final else w_dense                   # (1, Kout) or (Kout, d_out)

    mats = w_mats + [w_o.astype(jnp.float32)]
    if extra_out_mat is not None:
        mats.append(extra_out_mat.astype(jnp.float32))
    bias_rows = b_rows + [b_o.astype(jnp.float32)]

    # ---------------- one weight slab + one bias slab (DMA consolidation) ----
    lane_w = max(max(m.shape[1] for m in mats), max(r.shape[0] for r in bias_rows))
    entries, padded, cur = [], [], 0
    for m in mats:
        nr, nc = m.shape
        pr = (-nr) % 8                                                 # keep 8-row alignment
        padded.append(jnp.pad(m, ((0, pr), (0, lane_w - nc))))
        entries.append((cur, nr, nc))
        cur += nr + pr
    entries = tuple(entries)
    w_slab = jnp.concatenate(padded, axis=0).astype(param_dtype)
    b_slab = jnp.stack([jnp.pad(r, (0, lane_w - r.shape[0])) for r in bias_rows],
                       axis=0).astype(jnp.float32)

    # ---------------- per-row mask coefficients ------------------------------
    if masked:
        m = masks.astype(jnp.float32)
        if flips:
            m = 1.0 - m
        # Precondition: no all-zero mask rows (0/0 -> NaN, same as the reference).
        coef = m / jnp.sum(m, axis=1, keepdims=True)                   # (B, E)
        if n_hidden == 0:
            coef_in = coef
        else:
            coef_in = jnp.concatenate(
                [jnp.repeat(coef, d_last, axis=1), coef], axis=1)      # (B, K + E)

    out_idx = n_hidden

    # ---------------- kernel --------------------------------------------------
    def kernel(x_ref, w_ref, b_ref, *rest):
        if masked:
            coef_ref, o_ref = rest
        else:
            (o_ref,) = rest

        def mm(a, b):
            return jnp.dot(a.astype(b.dtype), b, preferred_element_type=jnp.float32)

        h = x_ref[...].astype(jnp.float32)

        for li in range(n_hidden):
            r0, nr, nc = entries[li]
            w = w_ref[r0:r0 + nr, 0:nc]                                # free static view
            b = b_ref[li:li + 1, 0:nc]
            h = jnp.maximum(mm(h, w) + b, 0.0)                         # matmul + bias + relu

        r0, nr, nc = entries[out_idx]
        if not masked:
            if reduce_final:
                w_row = w_ref[r0:r0 + 1, 0:nc].astype(jnp.float32)     # (1, Kout)
                out = jnp.sum(h * w_row, axis=-1, keepdims=True) + b_ref[n_hidden:n_hidden + 1, 0:1]
            else:
                out = mm(h, w_ref[r0:r0 + nr, 0:nc]) + b_ref[n_hidden:n_hidden + 1, 0:d_out]
        else:
            if n_hidden == 0:
                # degenerate no-hidden-layer case: per-member combine
                tmp = mm(h, w_ref[r0:r0 + nr, 0:nc]) + b_ref[0:1, 0:nc]
                coef = coef_ref[...]                                   # (B, E)
                out = tmp[:, 0:d_out] * coef[:, 0:1]
                for e in range(1, E):
                    out = out + tmp[:, e * d_out:(e + 1) * d_out] * coef[:, e:e + 1]
            else:
                coef_all = coef_ref[...]                               # (B, K + E)
                hc = h * coef_all[:, 0:K]                              # one VPU scale
                coef_small = coef_all[:, K:K + E]                      # (B, E)
                if reduce_final:
                    w_row = w_ref[r0:r0 + 1, 0:K].astype(jnp.float32)  # (1, K)
                    bout_row = b_ref[n_hidden:n_hidden + 1, 0:E]       # (1, E)
                    out = (jnp.sum(hc * w_row, axis=-1, keepdims=True)
                           + jnp.sum(coef_small * bout_row, axis=-1, keepdims=True))
                else:
                    w = w_ref[r0:r0 + nr, 0:d_out]                     # (K, d_out)
                    rb0, bnr, bnc = entries[out_idx + 1]
                    bmat = w_ref[rb0:rb0 + bnr, 0:bnc]                 # (E, d_out)
                    out = mm(hc, w) + mm(coef_small, bmat)

        o_ref[...] = out.astype(o_ref.dtype)

    # ---------------- batch tiling (parallel grid axis for large B) ----------
    if B > 512 and B % 256 == 0:
        tb = 256
    elif B > 512 and B % 128 == 0:
        tb = 128
    else:
        tb = B
    nb = B // tb

    in_specs = [
        pl.BlockSpec((tb, d_in), lambda i: (i, 0)),
        pl.BlockSpec(w_slab.shape, lambda i: (0, 0)),                  # weights stay resident
        pl.BlockSpec(b_slab.shape, lambda i: (0, 0)),
    ]
    inputs = [x, w_slab, b_slab]
    if masked:
        in_specs.append(pl.BlockSpec((tb, coef_in.shape[1]), lambda i: (i, 0)))
        inputs.append(coef_in)
    out_specs = pl.BlockSpec((tb, d_out), lambda i: (i, 0))

    # ---------------- cost estimate + VMEM budget -----------------------------
    flops = 0
    for _, nr, nc in entries[:n_hidden]:
        flops += 2 * B * nr * nc
    _, nr, nc = entries[out_idx]
    flops += 2 * B * nr * nc
    bytes_accessed = sum(int(np.prod(a.shape)) * a.dtype.itemsize for a in inputs) + B * d_out * 4
    cost = pl.CostEstimate(flops=int(flops), transcendentals=0,
                           bytes_accessed=int(bytes_accessed))

    block_bytes = (tb * d_in * 4
                   + int(np.prod(w_slab.shape)) * w_slab.dtype.itemsize
                   + int(np.prod(b_slab.shape)) * 4
                   + tb * d_out * 4)
    if masked:
        block_bytes += tb * coef_in.shape[1] * 4
    vmem_limit = int(min(64 * 2 ** 20, max(32 * 2 ** 20, 4 * block_bytes)))

    return pl.pallas_call(
        kernel,
        out_shape=jax.ShapeDtypeStruct((B, d_out), jnp.float32),
        grid_spec=pltpu.PrefetchScalarGridSpec(
            num_scalar_prefetch=0,
            grid=(nb,),
            in_specs=in_specs,
            out_specs=out_specs),
        compiler_params=pltpu.CompilerParams(
            dimension_semantics=("parallel",),
            vmem_limit_bytes=vmem_limit),
        cost_estimate=cost,
    )(*inputs)


def mlp_forward(x, hidden_ws, hidden_bs, w_out, b_out, masks=None, flips=False,
                param_dtype=jnp.float32, target_drop_rate=0.0, layer_norm=False):
    """Pallas implementation of Mlp.forward.

    x:          (B, input_size) float32
    hidden_ws:  list of (E, d_prev, d_i)
    hidden_bs:  list of (E, 1, d_i)
    w_out:      (E, d_last, output_size)
    b_out:      (E, 1, output_size)
    masks:      optional (B, E); rows must not be all-zero (0/0 -> NaN, as in torch)
    """
    if target_drop_rate > 0.0:
        raise NotImplementedError("target_drop_rate > 0 (dropout) not implemented")
    if layer_norm:
        raise NotImplementedError("layer_norm=True not implemented")
    return _mlp_forward_impl(x, hidden_ws, hidden_bs, w_out, b_out, masks,
                             flips=bool(flips), param_dtype=param_dtype)


def _ref_forward(x, hidden_ws, hidden_bs, w_out, b_out, masks=None, flips=False):
    """Pure-JAX reference matching the torch code."""
    E = w_out.shape[0]
    B = x.shape[0]
    hidden = jnp.broadcast_to(x[None], (E, B, x.shape[1]))
    for w, b in zip(hidden_ws, hidden_bs):
        hidden = jax.nn.relu(jnp.einsum("ebi,eio->ebo", hidden, w,
                                        precision=jax.lax.Precision.HIGHEST) + b)
    out = jnp.einsum("ebi,eio->ebo", hidden, w_out,
                     precision=jax.lax.Precision.HIGHEST) + b_out
    if masks is None:
        mask_t = jnp.ones((E, B, 1), jnp.float32)
    else:
        mask_t = jnp.transpose(masks, (1, 0))[..., None]
        if flips:
            mask_t = 1.0 - mask_t
    return jnp.sum(out * mask_t, axis=0) / jnp.sum(mask_t, axis=0)


def _xavier_uniform(key, shape):
    # torch xavier_uniform on (E, fan_in, fan_out): bound = sqrt(6/(fan_in+fan_out))
    fan_in, fan_out = shape[-2], shape[-1]
    bound = float(np.sqrt(6.0 / (fan_in + fan_out)))
    return jax.random.uniform(key, shape, jnp.float32, minval=-bound, maxval=bound)


if __name__ == "__main__":
    input_size = 16
    hidden_sizes = (32, 32)
    output_size = 1
    ensemble_size = 4
    batch = 8

    key = jax.random.PRNGKey(0)
    keys = jax.random.split(key, 12)

    x = jax.random.normal(keys[0], (batch, input_size), jnp.float32)

    hidden_ws, hidden_bs = [], []
    d_prev = input_size
    kidx = 1
    for h in hidden_sizes:
        hidden_ws.append(_xavier_uniform(keys[kidx], (ensemble_size, d_prev, h)))
        hidden_bs.append(_xavier_uniform(keys[kidx + 1], (ensemble_size, 1, h)))
        kidx += 2
        d_prev = h
    w_out = _xavier_uniform(keys[kidx], (ensemble_size, d_prev, output_size))
    b_out = jnp.zeros((ensemble_size, 1, output_size), jnp.float32)

    # (a) default path (masks=None), d_out == 1 -> lane-reduction output
    result = jax.block_until_ready(mlp_forward(x, hidden_ws, hidden_bs, w_out, b_out))
    expected = _ref_forward(x, hidden_ws, hidden_bs, w_out, b_out)
    np.testing.assert_allclose(np.asarray(result), np.asarray(expected),
                               rtol=1e-4, atol=1e-5)

    # (b) explicit masks (B, E) -- coefficient-scaled lane reduction
    masks = (jax.random.uniform(keys[6], (batch, ensemble_size)) > 0.3).astype(jnp.float32)
    masks = masks.at[:, 0].set(1.0)  # precondition: no all-zero rows (0/0 -> NaN as in the reference)
    result_m = jax.block_until_ready(
        mlp_forward(x, hidden_ws, hidden_bs, w_out, b_out, masks=masks))
    expected_m = _ref_forward(x, hidden_ws, hidden_bs, w_out, b_out, masks=masks)
    np.testing.assert_allclose(np.asarray(result_m), np.asarray(expected_m),
                               rtol=1e-4, atol=1e-5)

    # (c) multi-column output head (exercises the MXU output-matmul path)
    w_out3 = _xavier_uniform(keys[7], (ensemble_size, d_prev, 3))
    b_out3 = 0.1 * jax.random.normal(keys[8], (ensemble_size, 1, 3), jnp.float32)
    result3 = jax.block_until_ready(mlp_forward(x, hidden_ws, hidden_bs, w_out3, b_out3))
    expected3 = _ref_forward(x, hidden_ws, hidden_bs, w_out3, b_out3)
    np.testing.assert_allclose(np.asarray(result3), np.asarray(expected3),
                               rtol=1e-4, atol=1e-5)

    # (d) masked multi-column output (dense vstacked W_out, no block-diag / member loop)
    result3m = jax.block_until_ready(
        mlp_forward(x, hidden_ws, hidden_bs, w_out3, b_out3, masks=masks))
    expected3m = _ref_forward(x, hidden_ws, hidden_bs, w_out3, b_out3, masks=masks)
    np.testing.assert_allclose(np.asarray(result3m), np.asarray(expected3m),
                               rtol=1e-4, atol=1e-5)

    # (e) bf16 weights (v6e/v7x MXU-native path); looser tolerance for bf16 rounding
    result_bf16 = jax.block_until_ready(
        mlp_forward(x, hidden_ws, hidden_bs, w_out, b_out, param_dtype=jnp.bfloat16))
    np.testing.assert_allclose(np.asarray(result_bf16), np.asarray(expected),
                               rtol=5e-2, atol=5e-2)

    print("KERNEL_OK")
</pallas_src>

<mosaic_0001>
module attributes {stable_mosaic.version = 11 : i64} {
  func.func @kernel(%arg0: i32, %arg1: memref<8x16xf32, #tpu.memory_space<vmem>>, %arg2: memref<152x128xf32, #tpu.memory_space<vmem>>, %arg3: memref<3x128xf32, #tpu.memory_space<vmem>>, %arg4: memref<8x1xf32, #tpu.memory_space<vmem>>) attributes {dimension_semantics = [#tpu.dimension_semantics<parallel>], iteration_bounds = array<i64: 1>, scalar_prefetch = 0 : i64, scratch_operands = 0 : i64, tpu.core_type = #tpu.core_type<tc>, window_params = [{transform_indices = @transform_0, window_bounds = array<i64: 8, 16>}, {pipeline_mode = #tpu.pipeline_mode<synchronous>, transform_indices = @transform_1, window_bounds = array<i64: 152, 128>}, {pipeline_mode = #tpu.pipeline_mode<synchronous>, transform_indices = @transform_2, window_bounds = array<i64: 3, 128>}, {transform_indices = @transform_3, window_bounds = array<i64: 8, 1>}]} {
    %c0 = arith.constant 0 : index
    %c0_0 = arith.constant 0 : index
    %0 = vector.load %arg1[%c0, %c0_0] : memref<8x16xf32, #tpu.memory_space<vmem>>, vector<8x16xf32>
    %c0_1 = arith.constant 0 : index
    %c0_2 = arith.constant 0 : index
    %1 = vector.load %arg2[%c0_1, %c0_2] : memref<152x128xf32, #tpu.memory_space<vmem>>, vector<16x128xf32>
    %c0_3 = arith.constant 0 : index
    %c0_4 = arith.constant 0 : index
    %2 = vector.load %arg3[%c0_3, %c0_4] : memref<3x128xf32, #tpu.memory_space<vmem>>, vector<1x128xf32>
    %cst = arith.constant dense<0.000000e+00> : vector<8x128xf32>
    %3 = tpu.matmul %0, %1, %cst {dimension_numbers = #tpu.dot_dimension_numbers<[1], [0], [0], [1], [0, 0, 1, 1], [], []>} : vector<8x16xf32>, vector<16x128xf32>, vector<8x128xf32> -> vector<8x128xf32>
    %4 = vector.broadcast %2 : vector<1x128xf32> to vector<8x128xf32>
    %5 = arith.addf %3, %4 : vector<8x128xf32>
    %cst_5 = arith.constant 0.000000e+00 : f32
    %6 = vector.broadcast %cst_5 : f32 to vector<8x128xf32>
    %7 = arith.maximumf %5, %6 : vector<8x128xf32>
    %c16 = arith.constant 16 : index
    %c0_6 = arith.constant 0 : index
    %8 = vector.load %arg2[%c16, %c0_6] : memref<152x128xf32, #tpu.memory_space<vmem>>, vector<128x128xf32>
    %c1 = arith.constant 1 : index
    %c0_7 = arith.constant 0 : index
    %9 = vector.load %arg3[%c1, %c0_7] : memref<3x128xf32, #tpu.memory_space<vmem>>, vector<1x128xf32>
    %cst_8 = arith.constant dense<0.000000e+00> : vector<8x128xf32>
    %10 = tpu.matmul %7, %8, %cst_8 {dimension_numbers = #tpu.dot_dimension_numbers<[1], [0], [0], [1], [0, 0, 1, 1], [], []>} : vector<8x128xf32>, vector<128x128xf32>, vector<8x128xf32> -> vector<8x128xf32>
    %11 = vector.broadcast %9 : vector<1x128xf32> to vector<8x128xf32>
    %12 = arith.addf %10, %11 : vector<8x128xf32>
    %cst_9 = arith.constant 0.000000e+00 : f32
    %13 = vector.broadcast %cst_9 : f32 to vector<8x128xf32>
    %14 = arith.maximumf %12, %13 : vector<8x128xf32>
    %c144 = arith.constant 144 : index
    %c0_10 = arith.constant 0 : index
    %15 = vector.load %arg2[%c144, %c0_10] : memref<152x128xf32, #tpu.memory_space<vmem>>, vector<1x128xf32>
    %16 = vector.broadcast %15 : vector<1x128xf32> to vector<8x128xf32>
    %17 = arith.mulf %14, %16 : vector<8x128xf32>
    %cst_11 = arith.constant dense<0.000000e+00> : vector<8xf32>
    %18 = vector.multi_reduction <add>, %17, %cst_11 [1] : vector<8x128xf32> to vector<8xf32>
    %19 = vector.shape_cast %18 : vector<8xf32> to vector<8x1xf32>
    %c2 = arith.constant 2 : index
    %c0_12 = arith.constant 0 : index
    %20 = vector.load %arg3[%c2, %c0_12] : memref<3x128xf32, #tpu.memory_space<vmem>>, vector<1x1xf32>
    %21 = vector.broadcast %20 : vector<1x1xf32> to vector<8x1xf32>
    %22 = arith.addf %19, %21 : vector<8x1xf32>
    %c0_13 = arith.constant 0 : index
    %c0_14 = arith.constant 0 : index
    %23 = vector.load %arg4[%c0_13, %c0_14] : memref<8x1xf32, #tpu.memory_space<vmem>>, vector<8x1xf32>
    tpu.vector_store %arg4[%c0_13, %c0_14], %22 {strides = array<i32>} : memref<8x1xf32, #tpu.memory_space<vmem>>, vector<8x1xf32>,
    return
  }
  func.func @transform_0(%arg0: i32) -> (i32, i32) {
    %c0_i32 = arith.constant 0 : i32
    %c0_i32_0 = arith.constant 0 : i32
    return %arg0, %c0_i32 : i32, i32
  }
  func.func @transform_1(%arg0: i32) -> (i32, i32) {
    %c0_i32 = arith.constant 0 : i32
    %c0_i32_0 = arith.constant 0 : i32
    %c0_i32_1 = arith.constant 0 : i32
    return %c0_i32, %c0_i32_0 : i32, i32
  }
  func.func @transform_2(%arg0: i32) -> (i32, i32) {
    %c0_i32 = arith.constant 0 : i32
    %c0_i32_0 = arith.constant 0 : i32
    %c0_i32_1 = arith.constant 0 : i32
    return %c0_i32, %c0_i32_0 : i32, i32
  }
  func.func @transform_3(%arg0: i32) -> (i32, i32) {
    %c0_i32 = arith.constant 0 : i32
    %c0_i32_0 = arith.constant 0 : i32
    return %arg0, %c0_i32 : i32, i32
  }
}

</mosaic_0001>

<llo_original>
// kernel: _mlp_forward_impl.1
$region0: #{_mlp_forward_impl.1}
  #allocation0 [shape = 'u32[]', space=smem, size = 0x4, offset = 0x4, fixed_abs, tag = 'smem constant byte address 0x4 - core index']
  #allocation1 [shape = 'u32[144,128]{1,0:T(1,128)}', space=vmem, size = 0x12000, scoped, tag = 'internal scratch']
  %s0 = inlined_call_operand.vmem [shape: f32[8,16], index: 0, kind: input, shape index: {}]
  %s1 = inlined_call_operand.vmem [shape: f32[152,128], index: 1, kind: input, shape index: {}]
  %s2 = inlined_call_operand.vmem [shape: f32[3,128], index: 2, kind: input, shape index: {}]
  %s3 = inlined_call_operand.vmem [shape: f32[8,1], index: 3, kind: output, shape index: {}]
  %s4 = sld [smem:[#allocation0]]
  $region22: #{_mlp_forward_impl.1} parent=0
    _
  %s6 = ssub.s32 1, %s4
  %s7 = scalar_select 0, %s6, %s4
  // Predicated region
  $region2: #{_mlp_forward_impl.1} parent=0 // pred_check
    _
  $region3: #{_mlp_forward_impl.1} parent=0 // pred_check_branch
    %9 = sbr.rel (0) target = $region5
  $region4: #{_mlp_forward_impl.1} parent=0 // pred_region
    _
  $region5: #{_mlp_forward_impl.1} parent=0 // pred_fallthru
    _
  // Predicated region
  $region6: #{_mlp_forward_impl.1} parent=0 // pred_check
    _
  $region7: #{_mlp_forward_impl.1} parent=0 // pred_check_branch
    %11 = sbr.rel (0) target = $region9
  $region8: #{_mlp_forward_impl.1} parent=0 // pred_region
    _
  $region9: #{_mlp_forward_impl.1} parent=0 // pred_fallthru
    _
  // Predicated region
  $region10: #{_mlp_forward_impl.1} parent=0 // pred_check
    _
  $region11: #{_mlp_forward_impl.1} parent=0 // pred_check_branch
    %13 = sbr.rel (0) target = $region13
  $region12: #{_mlp_forward_impl.1} parent=0 // pred_region
    _
  $region13: #{_mlp_forward_impl.1} parent=0 // pred_fallthru
    _
  %v14 = vld [vmem:[%s0] sm:$0xff]
  %v15 = vld [vmem:[%s1] sm:$0xff]
  %v16 = vld [vmem:[%s1 + $0x8] sm:$0xff]
  %v17 = vld [vmem:[%s2] sm:$0x1]
  %v18 = vlaneseq
  %v19 = vshrl.u32 %v18, 7
  %v20 = vsub.s32 0, %v19
  %v21 = vrot.slane %v17, %v20
  %vm22 = vcmask 130048
  %v24 = vsel %vm22, %v14, 0
  %26 = vmatprep.subr.mxu0 0.0
  %27 = vmatpush1.msra.mxu0 %v15
  %28 = vmatprep.subr.mxu0 0.0
  %29 = vmatpush1.msra.mxu0 %v16
  %30 = vmatprep.subr.mxu0 0.0
  %31 = vmatpush1.msra.mxu0 0.0
  %32 = vmatprep.subr.mxu0 0.0
  %33 = vmatpush1.msra.mxu0 0.0
  %34 = vmatprep.subr.mxu0 0.0
  %35 = vmatpush1.msra.mxu0 0.0
  %36 = vmatprep.subr.mxu0 0.0
  %37 = vmatpush1.msra.mxu0 0.0
  %38 = vmatprep.subr.mxu0 0.0
  %39 = vmatpush1.msra.mxu0 0.0
  %40 = vmatprep.subr.mxu0 0.0
  %41 = vmatpush1.msra.mxu0 0.0
  %42 = vmatprep.subr.mxu0 0.0
  %43 = vmatpush1.msra.mxu0 0.0
  %44 = vmatprep.subr.mxu0 0.0
  %45 = vmatpush1.msra.mxu0 0.0
  %46 = vmatprep.subr.mxu0 0.0
  %47 = vmatpush1.msra.mxu0 0.0
  %48 = vmatprep.subr.mxu0 0.0
  %49 = vmatpush1.msra.mxu0 0.0
  %50 = vmatprep.subr.mxu0 0.0
  %51 = vmatpush1.msra.mxu0 0.0
  %52 = vmatprep.subr.mxu0 0.0
  %53 = vmatpush1.msra.mxu0 0.0
  %54 = vmatprep.subr.mxu0 0.0
  %55 = vmatpush1.msra.mxu0 0.0
  %56 = vmatprep.subr.mxu0 0.0
  %57 = vmatpush1.msra.mxu0 0.0
  %58 = vmatprep.subr.mxu0 0.0
  %59 = vmatpush1.msra.mxu0 0.0
  %60 = vmatprep.subr.mxu0 0.0
  %61 = vmatpush1.msra.mxu0 0.0
  %62 = vmatprep.subr.mxu0 0.0
  %63 = vmatpush1.msra.mxu0 0.0
  %64 = vmatprep.subr.mxu0 0.0
  %65 = vmatpush1.msra.mxu0 0.0
  %66 = vmatprep.subr.mxu0 0.0
  %67 = vmatpush1.msra.mxu0 0.0
  %68 = vmatprep.subr.mxu0 0.0
  %69 = vmatpush1.msra.mxu0 0.0
  %70 = vmatprep.subr.mxu0 0.0
  %71 = vmatpush1.msra.mxu0 0.0
  %72 = vmatprep.subr.mxu0 0.0
  %73 = vmatpush1.msra.mxu0 0.0
  %74 = vmatprep.subr.mxu0 0.0
  %75 = vmatpush1.msra.mxu0 0.0
  %76 = vmatprep.subr.mxu0 0.0
  %77 = vmatpush1.msra.mxu0 0.0
  %78 = vmatprep.subr.mxu0 0.0
  %79 = vmatpush1.msra.mxu0 0.0
  %80 = vmatprep.subr.mxu0 0.0
  %81 = vmatpush1.msra.mxu0 0.0
  %82 = vmatprep.subr.mxu0 0.0
  %83 = vmatpush1.msra.mxu0 0.0
  %84 = vmatprep.subr.mxu0 0.0
  %85 = vmatpush1.msra.mxu0 0.0
  %86 = vmatprep.subr.mxu0 0.0
  %87 = vmatpush1.msra.mxu0 0.0
  %88 = vmatprep.subr.mxu0 0.0
  %89 = vmatpush1.msra.mxu0 0.0
  %90 = vmatprep.mubr.f32.mxu0 0.0
  %91 = vmatmul.mubr.f32.gmra.mrb[0].mxu0 %v24
  %v92 = vpop.f32.mrb[0].mxu0
  %v93 = vadd.f32 %v21, %v92
  %v94 = vpop.f32.mrb[0].mxu0
  %95 = vdwg.mxu0
  %v96 = vmax.f32 %v93, 0.0
  %v97 = vld [vmem:[%s1 + $0x10] sm:$0xff]
  %v98 = vld [vmem:[%s1 + $0x18] sm:$0xff]
  %v99 = vld [vmem:[%s1 + $0x20] sm:$0xff]
  %v100 = vld [vmem:[%s1 + $0x28] sm:$0xff]
  %v101 = vld [vmem:[%s1 + $0x30] sm:$0xff]
  %v102 = vld [vmem:[%s1 + $0x38] sm:$0xff]
  %v103 = vld [vmem:[%s1 + $0x40] sm:$0xff]
  %v104 = vld [vmem:[%s1 + $0x48] sm:$0xff]
  %v105 = vld [vmem:[%s1 + $0x50] sm:$0xff]
  %v106 = vld [vmem:[%s1 + $0x58] sm:$0xff]
  %v107 = vld [vmem:[%s1 + $0x60] sm:$0xff]
  %v108 = vld [vmem:[%s1 + $0x68] sm:$0xff]
  %v109 = vld [vmem:[%s1 + $0x70] sm:$0xff]
  %v110 = vld [vmem:[%s1 + $0x78] sm:$0xff]
  %v111 = vld [vmem:[%s1 + $0x80] sm:$0xff]
  %v112 = vld [vmem:[%s1 + $0x88] sm:$0xff]
  %v113 = vld [vmem:[%s2 + $0x1] sm:$0x1]
  %v114 = vlaneseq
  %v115 = vshrl.u32 %v114, 7
  %v116 = vsub.s32 0, %v115
  %v117 = vrot.slane %v113, %v116
  %118 = vmatprep.subr.mxu0 0.0
  %119 = vmatpush1.msra.mxu0 %v97
  %120 = vmatprep.subr.mxu0 0.0
  %121 = vmatpush1.msra.mxu0 %v98
  %122 = vmatprep.subr.mxu0 0.0
  %123 = vmatpush1.msra.mxu0 %v99
  %124 = vmatprep.subr.mxu0 0.0
  %125 = vmatpush1.msra.mxu0 %v100
  %126 = vmatprep.subr.mxu0 0.0
  %127 = vmatpush1.msra.mxu0 %v101
  %128 = vmatprep.subr.mxu0 0.0
  %129 = vmatpush1.msra.mxu0 %v102
  %130 = vmatprep.subr.mxu0 0.0
  %131 = vmatpush1.msra.mxu0 %v103
  %132 = vmatprep.subr.mxu0 0.0
  %133 = vmatpush1.msra.mxu0 %v104
  %134 = vmatprep.subr.mxu0 0.0
  %135 = vmatpush1.msra.mxu0 %v105
  %136 = vmatprep.subr.mxu0 0.0
  %137 = vmatpush1.msra.mxu0 %v106
  %138 = vmatprep.subr.mxu0 0.0
  %139 = vmatpush1.msra.mxu0 %v107
  %140 = vmatprep.subr.mxu0 0.0
  %141 = vmatpush1.msra.mxu0 %v108
  %142 = vmatprep.subr.mxu0 0.0
  %143 = vmatpush1.msra.mxu0 %v109
  %144 = vmatprep.subr.mxu0 0.0
  %145 = vmatpush1.msra.mxu0 %v110
  %146 = vmatprep.subr.mxu0 0.0
  %147 = vmatpush1.msra.mxu0 %v111
  %148 = vmatprep.subr.mxu0 0.0
  %149 = vmatpush1.msra.mxu0 %v112
  %150 = vmatprep.subr.mxu0 0.0
  %151 = vmatpush1.msra.mxu0 0.0
  %152 = vmatprep.subr.mxu0 0.0
  %153 = vmatpush1.msra.mxu0 0.0
  %154 = vmatprep.subr.mxu0 0.0
  %155 = vmatpush1.msra.mxu0 0.0
  %156 = vmatprep.subr.mxu0 0.0
  %157 = vmatpush1.msra.mxu0 0.0
  %158 = vmatprep.subr.mxu0 0.0
  %159 = vmatpush1.msra.mxu0 0.0
  %160 = vmatprep.subr.mxu0 0.0
  %161 = vmatpush1.msra.mxu0 0.0
  %162 = vmatprep.subr.mxu0 0.0
  %163 = vmatpush1.msra.mxu0 0.0
  %164 = vmatprep.subr.mxu0 0.0
  %165 = vmatpush1.msra.mxu0 0.0
  %166 = vmatprep.subr.mxu0 0.0
  %167 = vmatpush1.msra.mxu0 0.0
  %168 = vmatprep.subr.mxu0 0.0
  %169 = vmatpush1.msra.mxu0 0.0
  %170 = vmatprep.subr.mxu0 0.0
  %171 = vmatpush1.msra.mxu0 0.0
  %172 = vmatprep.subr.mxu0 0.0
  %173 = vmatpush1.msra.mxu0 0.0
  %174 = vmatprep.subr.mxu0 0.0
  %175 = vmatpush1.msra.mxu0 0.0
  %176 = vmatprep.subr.mxu0 0.0
  %177 = vmatpush1.msra.mxu0 0.0
  %178 = vmatprep.subr.mxu0 0.0
  %179 = vmatpush1.msra.mxu0 0.0
  %180 = vmatprep.subr.mxu0 0.0
  %181 = vmatpush1.msra.mxu0 0.0
  %182 = vmatprep.mubr.f32.mxu0 0.0
  %183 = vmatmul.mubr.f32.gmra.mrb[0].mxu0 %v96
  %v184 = vpop.f32.mrb[0].mxu0
  %v185 = vadd.f32 %v117, %v184
  %v186 = vpop.f32.mrb[0].mxu0
  %187 = vdwg.mxu0
  %v188 = vmax.f32 %v185, 0.0
  %v189 = vld [vmem:[%s1 + $0x90] sm:$0x1]
  %v190 = vlaneseq
  %v191 = vshrl.u32 %v190, 7
  %v192 = vsub.s32 0, %v191
  %v193 = vrot.slane %v189, %v192
  %v194 = vmul.f32 %v188, %v193
  %195 = vadd.xlane.f32.xlu0 %v194
  %v196 = vpop.xlane.xlu0 %195
  %v197 = vld [vmem:[%s2 + $0x2] sm:$0x1]
  %v198 = vlaneseq
  %v199 = vshrl.u32 %v198, 7
  %v200 = vsub.s32 0, %v199
  %v201 = vrot.slane %v197, %v200
  %v202 = vadd.f32 %v196, %v201
  %vm203 = vcmask 7168
  %204 = vst.msk [vmem:[%s3] sm:$0xff] %vm203, %v202
  // Predicated region
  $region14: #{_mlp_forward_impl.1} parent=0 // pred_check
    _
  $region15: #{_mlp_forward_impl.1} parent=0 // pred_check_branch
    %206 = sbr.rel (0) target = $region17
  $region16: #{_mlp_forward_impl.1} parent=0 // pred_region
    _
  $region17: #{_mlp_forward_impl.1} parent=0 // pred_fallthru
    _
  // Predicated region
  $region18: #{_mlp_forward_impl.1} parent=0 // pred_check
    _
  $region19: #{_mlp_forward_impl.1} parent=0 // pred_check_branch
    %208 = sbr.rel (0) target = $region21
  $region20: #{_mlp_forward_impl.1} parent=0 // pred_region
    _
  $region21: #{_mlp_forward_impl.1} parent=0 // pred_fallthru
    _

</llo_original>
